<compile_context>
chip_gen: v5e
topology: v5e:2x2
jax: 0.10.0
libtpu: 0.0.40
codegen_flags: <defaults>
</compile_context>

<pallas_src>
import jax
import jax.numpy as jnp
from jax.experimental import pallas as pl
from jax.experimental.pallas import tpu as pltpu


def _round_up(a, b):
    return (a + b - 1) // b * b


def _tile_caps():
    """Per-generation (TR cap, THW cap, scoped-VMEM limit or None)."""
    try:
        kind = jax.devices()[0].device_kind.lower()
    except Exception:
        kind = ""
    if ("v5 lite" in kind) or ("v5e" in kind) or ("v5lite" in kind):
        # v5e: 16 MiB default scoped VMEM -> 1 MiB f32 blocks, ~4 MiB resident.
        return 128, 2048, None
    if "v6" in kind:
        # v6e: 128 MiB physical VMEM -> 4 MiB f32 blocks (~16 MiB resident
        # with in+out double buffering); raise the scoped limit explicitly.
        return 256, 4096, 96 * 1024 * 1024
    if "7" in kind:
        # v7x: only 64 MiB VMEM per TC -> same 4 MiB blocks, tighter limit.
        return 256, 4096, 48 * 1024 * 1024
    # Unknown / older generations: conservative defaults, default scope.
    return 128, 2048, None


def meta_aconc_elemwise_kernel(x_ref, scal_ref, o_ref):
    # x_ref    : (TR, THW) tile of the flattened (N*C, H*W) input.
    # scal_ref : (TR, 8)   packed per-row f32 scalars [d, a, p2, 0...],
    #            d = p1 - p2, a = beta * d, precomputed in the wrapper.
    # Edge tiles may contain garbage rows/lanes; any inf/NaN they produce is
    # never stored (Pallas masks partial-block stores), so this is safe.
    x = x_ref[...].astype(jnp.float32)
    scal = scal_ref[...]
    d = scal[:, 0:1]
    a = scal[:, 1:2]
    p2 = scal[:, 2:3]

    z = a * x
    sig = 0.5 * (jnp.tanh(0.5 * z) + 1.0)          # == sigmoid(z), single EUP op
    o_ref[...] = (x * (d * sig + p2)).astype(o_ref.dtype)


def meta_aconc(x, p1, p2, w1, b1, w2, b2, *, tr_cap=None, thw_cap=None,
               vmem_limit=None):
    """MetaAconC forward.

    x  : (N, C, H, W)  f32 or bf16
    p1 : (1, C, 1, 1)     p2 : (1, C, 1, 1)
    w1 : (C2, C, 1, 1)    b1 : (C2,)          (fc1, 1x1 conv)
    w2 : (C, C2, 1, 1)    b2 : (C,)           (fc2, 1x1 conv)
    """
    N, C, H, W = x.shape
    HW = H * W
    C2 = w1.shape[0]
    rows = N * C
    out_dtype = x.dtype

    # ---- beta path, hoisted out of the kernel (tiny; two small matmuls) ----
    # Explicit f32 accumulate dtype so a bf16 input never materializes an f32
    # copy of x in HBM: the convert fuses into the reduction.
    xm = jnp.mean(x.reshape(N, C, HW), axis=-1, dtype=jnp.float32)        # (N, C)
    w1m = w1.reshape(C2, C).astype(jnp.float32)
    w2m = w2.reshape(C, C2).astype(jnp.float32)
    h = xm @ w1m.T + b1.astype(jnp.float32).reshape(1, C2)                # (N, C2)
    beta = jax.nn.sigmoid(h @ w2m.T + b2.astype(jnp.float32).reshape(1, C))  # (N, C)

    # ---- packed per-row scalar operand [d, a, p2, pad...] -------------------
    d_c = (p1 - p2).reshape(1, C).astype(jnp.float32)                     # (1, C)
    p2_c = p2.reshape(1, C).astype(jnp.float32)
    d_row = jnp.broadcast_to(d_c, (N, C)).reshape(rows)
    p2_row = jnp.broadcast_to(p2_c, (N, C)).reshape(rows)
    a_row = (beta * d_c).reshape(rows)                                    # beta*(p1-p2)
    zeros = jnp.zeros((rows,), jnp.float32)
    scal = jnp.stack(
        [d_row, a_row, p2_row, zeros, zeros, zeros, zeros, zeros], axis=-1)  # (rows, 8)

    # ---- lane-dense 2D slab; NO padding / slicing copies --------------------
    x2 = x.reshape(rows, HW)

    if tr_cap is None or thw_cap is None or vmem_limit is None:
        auto_tr, auto_thw, auto_vmem = _tile_caps()
        tr_cap = tr_cap if tr_cap is not None else auto_tr
        thw_cap = thw_cap if thw_cap is not None else auto_thw
        if vmem_limit is None:
            vmem_limit = auto_vmem

    THW = min(_round_up(HW, 128), thw_cap)      # lane-aligned block width
    TR = min(_round_up(rows, 8), tr_cap)        # sublane-aligned block height
    # hw axis innermost: the (TR, 8) scalar block index is constant across the
    # inner sweep, so Pallas does not re-DMA it every step.
    grid = (pl.cdiv(rows, TR), pl.cdiv(HW, THW))

    cp_kwargs = dict(dimension_semantics=("parallel", "parallel"))
    if vmem_limit is not None:
        cp_kwargs["vmem_limit_bytes"] = int(vmem_limit)

    out = pl.pallas_call(
        meta_aconc_elemwise_kernel,
        out_shape=jax.ShapeDtypeStruct((rows, HW), out_dtype),
        grid_spec=pltpu.PrefetchScalarGridSpec(
            num_scalar_prefetch=0,
            grid=grid,
            in_specs=[
                pl.BlockSpec((TR, THW), lambda r, s: (r, s)),
                pl.BlockSpec((TR, 8), lambda r, s: (r, 0)),
            ],
            out_specs=pl.BlockSpec((TR, THW), lambda r, s: (r, s)),
        ),
        compiler_params=pltpu.CompilerParams(**cp_kwargs),
    )(x2, scal)

    return out.reshape(N, C, H, W)


def meta_aconc_ref(x, p1, p2, w1, b1, w2, b2):
    """Pure-JAX reference mirroring the PyTorch forward (f32)."""
    x = x.astype(jnp.float32)
    y = x.mean(axis=2, keepdims=True).mean(axis=3, keepdims=True)         # (N, C, 1, 1)
    C2, C = w1.shape[0], w1.shape[1]
    y1 = jnp.einsum("ncij,oc->noij", y, w1.reshape(C2, C)) + b1.reshape(1, C2, 1, 1)
    y2 = jnp.einsum("noij,co->ncij", y1, w2.reshape(C, C2)) + b2.reshape(1, C, 1, 1)
    beta = jax.nn.sigmoid(y2)
    dpx = (p1 - p2) * x
    return dpx * jax.nn.sigmoid(beta * dpx) + p2 * x


if __name__ == "__main__":
    # Module config: c1 = 4 channels, r = 16 -> c2 = max(16, 4 // 16) = 16
    N, C, H, W = 2, 4, 16, 16
    C2 = max(16, C // 16)

    key = jax.random.PRNGKey(0)
    kx, kp1, kp2, kw1, kb1, kw2, kb2 = jax.random.split(key, 7)

    x = jax.random.normal(kx, (N, C, H, W), dtype=jnp.float32)

    # Deterministic synthetic parameters (shapes match nn.Parameter / nn.Conv2d)
    p1 = jax.random.normal(kp1, (1, C, 1, 1), dtype=jnp.float32)
    p2 = jax.random.normal(kp2, (1, C, 1, 1), dtype=jnp.float32)
    w1 = jax.random.normal(kw1, (C2, C, 1, 1), dtype=jnp.float32) * 0.1   # fc1 weight
    b1 = jax.random.normal(kb1, (C2,), dtype=jnp.float32) * 0.1           # fc1 bias
    w2 = jax.random.normal(kw2, (C, C2, 1, 1), dtype=jnp.float32) * 0.1   # fc2 weight
    b2 = jax.random.normal(kb2, (C,), dtype=jnp.float32) * 0.1            # fc2 bias

    ref = meta_aconc_ref(x, p1, p2, w1, b1, w2, b2)

    # f32 path.
    out = jax.block_until_ready(meta_aconc(x, p1, p2, w1, b1, w2, b2))
    assert out.shape == (N, C, H, W)
    assert jnp.allclose(out, ref, atol=1e-4, rtol=1e-4), "f32 mismatch vs reference"

    # bf16 I/O path (halves HBM traffic; math stays f32 in-kernel) with an
    # actual accuracy check against the f32 reference.
    out_bf16 = jax.block_until_ready(
        meta_aconc(x.astype(jnp.bfloat16), p1, p2, w1, b1, w2, b2))
    assert out_bf16.shape == (N, C, H, W)
    assert out_bf16.dtype == jnp.bfloat16
    assert jnp.allclose(out_bf16.astype(jnp.float32), ref, atol=5e-2, rtol=5e-2), \
        "bf16 mismatch vs reference"

    # Non-(8,128)-aligned shapes exercise the cdiv / partial-edge-block path
    # (rows = 12, HW = 150) with no wrapper-side padding or slicing.
    xr = jax.random.normal(kx, (3, C, 10, 15), dtype=jnp.float32)
    outr = jax.block_until_ready(meta_aconc(xr, p1, p2, w1, b1, w2, b2))
    refr = meta_aconc_ref(xr, p1, p2, w1, b1, w2, b2)
    assert outr.shape == xr.shape
    assert jnp.allclose(outr, refr, atol=1e-4, rtol=1e-4), "ragged-shape mismatch"

    print("KERNEL_OK")
</pallas_src>

<mosaic_0001>
module attributes {stable_mosaic.version = 11 : i64} {
  func.func @meta_aconc_elemwise_kernel(%arg0: i32, %arg1: i32, %arg2: memref<8x256xf32, #tpu.memory_space<vmem>>, %arg3: memref<8x8xf32, #tpu.memory_space<vmem>>, %arg4: memref<8x256xf32, #tpu.memory_space<vmem>>) attributes {dimension_semantics = [#tpu.dimension_semantics<parallel>, #tpu.dimension_semantics<parallel>], iteration_bounds = array<i64: 1, 1>, scalar_prefetch = 0 : i64, scratch_operands = 0 : i64, tpu.core_type = #tpu.core_type<tc>, window_params = [{transform_indices = @transform_0, window_bounds = array<i64: 8, 256>}, {transform_indices = @transform_1, window_bounds = array<i64: 8, 8>}, {transform_indices = @transform_2, window_bounds = array<i64: 8, 256>}]} {
    %c0 = arith.constant 0 : index
    %c0_0 = arith.constant 0 : index
    %0 = vector.load %arg2[%c0, %c0_0] : memref<8x256xf32, #tpu.memory_space<vmem>>, vector<8x256xf32>
    %c0_1 = arith.constant 0 : index
    %c0_2 = arith.constant 0 : index
    %1 = vector.load %arg3[%c0_1, %c0_2] : memref<8x8xf32, #tpu.memory_space<vmem>>, vector<8x8xf32>
    %2 = vector.extract_strided_slice %1 {offsets = [0, 0], sizes = [8, 1], strides = [1, 1]} : vector<8x8xf32> to vector<8x1xf32>
    %3 = vector.extract_strided_slice %1 {offsets = [0, 1], sizes = [8, 1], strides = [1, 1]} : vector<8x8xf32> to vector<8x1xf32>
    %4 = vector.extract_strided_slice %1 {offsets = [0, 2], sizes = [8, 1], strides = [1, 1]} : vector<8x8xf32> to vector<8x1xf32>
    %5 = vector.broadcast %3 : vector<8x1xf32> to vector<8x256xf32>
    %6 = arith.mulf %5, %0 : vector<8x256xf32>
    %cst = arith.constant 5.000000e-01 : f32
    %7 = vector.broadcast %cst : f32 to vector<8x256xf32>
    %8 = arith.mulf %7, %6 : vector<8x256xf32>
    %9 = math.tanh %8 : vector<8x256xf32>
    %cst_3 = arith.constant 1.000000e+00 : f32
    %10 = vector.broadcast %cst_3 : f32 to vector<8x256xf32>
    %11 = arith.addf %9, %10 : vector<8x256xf32>
    %cst_4 = arith.constant 5.000000e-01 : f32
    %12 = vector.broadcast %cst_4 : f32 to vector<8x256xf32>
    %13 = arith.mulf %12, %11 : vector<8x256xf32>
    %14 = vector.broadcast %2 : vector<8x1xf32> to vector<8x256xf32>
    %15 = arith.mulf %14, %13 : vector<8x256xf32>
    %16 = vector.broadcast %4 : vector<8x1xf32> to vector<8x256xf32>
    %17 = arith.addf %15, %16 : vector<8x256xf32>
    %18 = arith.mulf %0, %17 : vector<8x256xf32>
    %c0_5 = arith.constant 0 : index
    %c0_6 = arith.constant 0 : index
    %19 = vector.load %arg4[%c0_5, %c0_6] : memref<8x256xf32, #tpu.memory_space<vmem>>, vector<8x256xf32>
    tpu.vector_store %arg4[%c0_5, %c0_6], %18 {strides = array<i32>} : memref<8x256xf32, #tpu.memory_space<vmem>>, vector<8x256xf32>,
    return
  }
  func.func @transform_0(%arg0: i32, %arg1: i32) -> (i32, i32) {
    %c0_i32 = arith.constant 0 : i32
    return %arg0, %arg1 : i32, i32
  }
  func.func @transform_1(%arg0: i32, %arg1: i32) -> (i32, i32) {
    %c0_i32 = arith.constant 0 : i32
    %c0_i32_0 = arith.constant 0 : i32
    return %arg0, %c0_i32 : i32, i32
  }
  func.func @transform_2(%arg0: i32, %arg1: i32) -> (i32, i32) {
    %c0_i32 = arith.constant 0 : i32
    return %arg0, %arg1 : i32, i32
  }
}

</mosaic_0001>

<llo_original>
// kernel: tpu_custom_call.1
$region0: #{tpu_custom_call.1}
  #allocation0 [shape = 'u32[]', space=smem, size = 0x4, offset = 0x4, fixed_abs, tag = 'smem constant byte address 0x4 - core index']
  #allocation1 [shape = 'u32[72,128]{1,0:T(1,128)}', space=vmem, size = 0x9000, scoped, tag = 'internal scratch']
  %s0 = inlined_call_operand.hbm [shape: f32[8,256], index: 0, kind: input, shape index: {}]
  %s1 = inlined_call_operand.hbm [shape: f32[8,8], index: 1, kind: input, shape index: {}]
  %s2 = inlined_call_operand.hbm [shape: f32[8,256], index: 2, kind: output, shape index: {}]
  %s3 = sld [smem:[#allocation0]]
  $region26: #{tpu_custom_call.1} parent=0
    _
  %s5 = ssub.s32 1, %s3
  %s6 = scalar_select 0, %s5, %s3
  $region1: #{tpu_custom_call.1} parent=0
    #allocation2 [shape = 'u8[8192]{0}', space=vmem, size = 0x2000, scoped, tag = 'input window, operand 0, single buffered']
    #allocation3 [shape = 's32[1]{0}', space=sflag, size = 0x4, scoped, tag = 'scoped memory for tpu_custom_call.1']
    #allocation4 [shape = 's32[1]{0}', space=sflag, size = 0x4, scoped, tag = 'scoped memory for tpu_custom_call.1']
    #allocation5 [shape = 'u8[4096]{0}', space=vmem, size = 0x1000, scoped, tag = 'input window, operand 1, single buffered']
    #allocation6 [shape = 's32[1]{0}', space=sflag, size = 0x4, scoped, tag = 'scoped memory for tpu_custom_call.1']
    #allocation7 [shape = 'u8[8192]{0}', space=vmem, size = 0x2000, scoped, tag = 'output window, operand 0, single buffered']
    %7 = vsyncpa [#allocation3], 0
    %8 = vsyncpa [#allocation6], 0
    %9 = vsyncpa [#allocation4], 0
    // Predicated region
    $region2: #{tpu_custom_call.1} parent=1 // pred_check
      _
    $region3: #{tpu_custom_call.1} parent=1 // pred_check_branch
      %11 = sbr.rel (0) target = $region5
    $region4: #{tpu_custom_call.1} parent=1 // pred_region
      %13 = vsyncadd [#allocation3], 0
      %s15 = sshll.u32 %s0, 4
      %s16 = int_to_ptr.hbm [resolvable:$true] %s15
      %s17 = sshll.u32 [#allocation2], 4
      %s18 = int_to_ptr.vmem [resolvable:$true] %s17
      %20 = dma.hbm_to_vmem [thread:$0]  %s16, 256, %s18, [#allocation3]
    $region5: #{tpu_custom_call.1} parent=1 // pred_fallthru
      _
    // Predicated region
    $region6: #{tpu_custom_call.1} parent=1 // pred_check
      _
    $region7: #{tpu_custom_call.1} parent=1 // pred_check_branch
      %22 = sbr.rel (0) target = $region9
    $region8: #{tpu_custom_call.1} parent=1 // pred_region
      %24 = vsyncadd [#allocation6], 0
      %s26 = sshll.u32 %s1, 4
      %s27 = int_to_ptr.hbm [resolvable:$true] %s26
      %s28 = sshll.u32 [#allocation5], 4
      %s29 = int_to_ptr.vmem [resolvable:$true] %s28
      %31 = dma.hbm_to_vmem [thread:$0]  %s27, 128, %s29, [#allocation6]
    $region9: #{tpu_custom_call.1} parent=1 // pred_fallthru
      _
    // Predicated region
    $region10: #{tpu_custom_call.1} parent=1 // pred_check
      _
    $region11: #{tpu_custom_call.1} parent=1 // pred_check_branch
      %33 = sbr.rel (0) target = $region13
    $region12: #{tpu_custom_call.1} parent=1 // pred_region
      %35 = dma.done [#allocation3], 256
    $region13: #{tpu_custom_call.1} parent=1 // pred_fallthru
      _
    // Predicated region
    $region14: #{tpu_custom_call.1} parent=1 // pred_check
      _
    $region15: #{tpu_custom_call.1} parent=1 // pred_check_branch
      %37 = sbr.rel (0) target = $region17
    $region16: #{tpu_custom_call.1} parent=1 // pred_region
      %39 = dma.done [#allocation6], 128
    $region17: #{tpu_custom_call.1} parent=1 // pred_fallthru
      _
    %v40 = vld [vmem:[#allocation2] sm:$0xff]
    %v41 = vld [vmem:[#allocation2 + $0x8] sm:$0xff]
    %v42 = vld [vmem:[#allocation5] sm:$0xff]
    %44 = vset.pattern.permute.xlu0 1
    %45 = vperm.xlu0 %44, %v42
    %v46 = vpop.permute.xlu0 %45
    %v48 = vmul.f32 %v46, %v40
    %v49 = vmul.f32 %v46, %v41
    %v50 = vmul.f32 %v48, 0.5
    %v51 = vmul.f32 %v49, 0.5
    %v52 = vtanh.pop %v50
    %v53 = vtanh.pop %v51
    %v54 = vadd.f32 %v52, 1.0
    %v55 = vadd.f32 %v53, 1.0
    %v56 = vmul.f32 %v54, 0.5
    %v57 = vmul.f32 %v55, 0.5
    %58 = vset.pattern.permute.xlu0 0
    %59 = vperm.xlu0 %58, %v42
    %v60 = vpop.permute.xlu0 %59
    %v62 = vmul.f32 %v60, %v56
    %v63 = vmul.f32 %v60, %v57
    %64 = vset.pattern.permute.xlu0 2
    %65 = vperm.xlu0 %64, %v42
    %v66 = vpop.permute.xlu0 %65
    %v68 = vadd.f32 %v62, %v66
    %v69 = vadd.f32 %v63, %v66
    %v70 = vmul.f32 %v40, %v68
    %v71 = vmul.f32 %v41, %v69
    %72 = vst [vmem:[#allocation7] sm:$0xff] %v70
    %73 = vst [vmem:[#allocation7 + $0x8] sm:$0xff] %v71
    // Predicated region
    $region18: #{tpu_custom_call.1} parent=1 // pred_check
      _
    $region19: #{tpu_custom_call.1} parent=1 // pred_check_branch
      %75 = sbr.rel (0) target = $region21
    $region20: #{tpu_custom_call.1} parent=1 // pred_region
      %77 = vsyncadd [#allocation4], 0
      %s79 = sshll.u32 [#allocation7], 4
      %s80 = int_to_ptr.vmem [resolvable:$true] %s79
      %s81 = sshll.u32 %s2, 4
      %s82 = int_to_ptr.hbm [resolvable:$true] %s81
      %84 = dma.vmem_to_hbm [thread:$0]  %s80, 256, %s82, [#allocation4]
    $region21: #{tpu_custom_call.1} parent=1 // pred_fallthru
      _
    // Predicated region
    $region22: #{tpu_custom_call.1} parent=1 // pred_check
      _
    $region23: #{tpu_custom_call.1} parent=1 // pred_check_branch
      %86 = sbr.rel (0) target = $region25
    $region24: #{tpu_custom_call.1} parent=1 // pred_region
      %88 = dma.done [#allocation4], 256
    $region25: #{tpu_custom_call.1} parent=1 // pred_fallthru
      _
    %89 = vsyncpa [#allocation3], 1
    %90 = vsyncpa [#allocation6], 1
    %91 = vsyncpa [#allocation4], 1

</llo_original>
